<compile_context>
chip_gen: v6e
topology: v6e:2x2x1
jax: 0.10.0
libtpu: 0.0.40
codegen_flags: <defaults>
</compile_context>

<pallas_src>
import jax
import jax.numpy as jnp
from jax.experimental import pallas as pl
from jax.experimental.pallas import tpu as pltpu

_LANE = 128
_SUBLANE = 8
_MAX_BLOCK_B = 1024  # keeps double-buffered x tiles well inside v5e's 16 MiB scoped VMEM


def _round_up(n, m):
    return ((n + m - 1) // m) * m


def _head_kernel(x_ref, w_ref, b_ref, o_ref):
    # x_ref : [block_b, F]       flattened (NCHW order) feature map (ragged last block OK)
    # w_ref : [F, OUT_pad=128]   fused classifier weight (W1^T @ W2^T, zero-padded columns)
    # b_ref : [1, OUT_pad]       fused bias (b1 @ W2^T + b2, zero-padded)
    # o_ref : [block_b, num_out] only the real logits are stored
    x = x_ref[...]
    xs = x * jax.nn.sigmoid(x)  # Swish (EUP logistic); applying after flatten is identical
    res = jnp.dot(xs, w_ref[...], preferred_element_type=jnp.float32) + b_ref[...]
    o_ref[...] = res[:, : o_ref.shape[-1]].astype(o_ref.dtype)


def prepare_classifier_params(w1, b1, w2, b2, feature_dim):
    """One-time (outside the per-call hot path) fusion of the two Linear layers.

    w1: [360, F] (PyTorch layout), b1: [360], w2: [4, 360], b2: [4].
    Returns (w_fused_pad [F, 128], b_fused_pad [1, 128]).  Only the output dim is padded
    (lane-dense weight); F is left unpadded.
    """
    w_fused = w1.T @ w2.T              # [F, 4]   exact fold: no activation between Linears
    b_fused = b1 @ w2.T + b2           # [4]
    out_pad = _LANE
    w_pad = jnp.zeros((feature_dim, out_pad), jnp.float32)
    w_pad = w_pad.at[:, : w_fused.shape[1]].set(w_fused.astype(jnp.float32))
    b_pad = jnp.zeros((1, out_pad), jnp.float32)
    b_pad = b_pad.at[0, : b_fused.shape[0]].set(b_fused.astype(jnp.float32))
    return w_pad, b_pad


def _pick_block_b(batch):
    if batch <= _SUBLANE:
        return _SUBLANE
    # >= 2 grid steps once batch > 8 so the "parallel" axis can split across v7x's two
    # TensorCores; the cap bounds VMEM (important for v5e's 16 MiB scoped default).
    return min(_MAX_BLOCK_B, _round_up(pl.cdiv(batch, 2), _SUBLANE))


def mnas_extra_classifier(feat, w_fused_pad, b_fused_pad, num_out=4):
    """feat: [B, 12, S, S] float32 (output of the MnasXs core) or pre-flattened [B, F].
    w_fused_pad / b_fused_pad: from prepare_classifier_params().
    Returns the Flatten2'd logits, shape [B * num_out]."""
    if feat.ndim == 4:
        # NCHW flatten, identical to torch.flatten. Ideally the backbone emits [B, F]
        # directly so this reshape is free of a relayout pass.
        feat = feat.reshape(feat.shape[0], -1)
    feat = feat.astype(jnp.float32)
    B, F = feat.shape
    F_w, out_pad = w_fused_pad.shape
    assert F == F_w, (F, F_w)

    block_b = _pick_block_b(B)
    grid = (pl.cdiv(B, block_b),)

    cost = pl.CostEstimate(
        flops=2 * B * F * out_pad,
        transcendentals=B * F,
        bytes_accessed=(B * F + F * out_pad + out_pad + B * num_out) * 4,
    )

    out = pl.pallas_call(
        _head_kernel,
        out_shape=jax.ShapeDtypeStruct((B, num_out), jnp.float32),
        grid=grid,
        in_specs=[
            pl.BlockSpec((block_b, F), lambda i: (i, 0)),      # batch-tiled activations
            pl.BlockSpec((F, out_pad), lambda i: (0, 0)),      # weight resident across tiles
            pl.BlockSpec((1, out_pad), lambda i: (0, 0)),      # bias resident across tiles
        ],
        out_specs=pl.BlockSpec((block_b, num_out), lambda i: (i, 0)),
        compiler_params=pltpu.CompilerParams(dimension_semantics=("parallel",)),
        cost_estimate=cost,
    )(feat, w_fused_pad, b_fused_pad)

    # TODO(synk): Flatten2 source not provided; assumed to flatten all dims -> 1D.
    return out.reshape(-1)


def _reference(feat_nchw, w1, b1, w2, b2):
    B = feat_nchw.shape[0]
    x = feat_nchw
    x = x * jax.nn.sigmoid(x)                        # Swish
    x = x.reshape(B, -1)                             # Flatten
    x = x @ w1.T + b1                                # Linear(F, 360)
    x = x @ w2.T + b2                                # Linear(360, 4)
    return x.reshape(-1)                             # Flatten2


if __name__ == "__main__":
    # Small, module-consistent shapes:
    #   input_size = 64 -> size_before_classifier = 64 // 32 = 2
    #   backbone output: [B, 12, 2, 2] -> F = 12 * 2**2 = 48
    B = 2
    input_size = 64
    downsample_rate = 32
    S = input_size // downsample_rate                 # 2
    C = 12
    F = C * S * S                                     # 48
    HIDDEN = 360
    OUT = 4

    key = jax.random.PRNGKey(0)
    k_feat, k_w1, k_b1, k_w2, k_b2 = jax.random.split(key, 5)

    feat = jax.random.normal(k_feat, (B, C, S, S), dtype=jnp.float32)
    # Deterministic synthetic parameters (shapes from the module's __init__).
    w1 = 0.02 * jax.random.normal(k_w1, (HIDDEN, F), dtype=jnp.float32)
    b1 = 0.02 * jax.random.normal(k_b1, (HIDDEN,), dtype=jnp.float32)
    w2 = 0.02 * jax.random.normal(k_w2, (OUT, HIDDEN), dtype=jnp.float32)
    b2 = 0.02 * jax.random.normal(k_b2, (OUT,), dtype=jnp.float32)

    # One-time parameter fusion, outside the per-call hot path.
    w_fused, b_fused = prepare_classifier_params(w1, b1, w2, b2, F)
    w_fused, b_fused = jax.block_until_ready((w_fused, b_fused))

    out = mnas_extra_classifier(feat, w_fused, b_fused, num_out=OUT)
    out = jax.block_until_ready(out)

    ref = _reference(feat, w1, b1, w2, b2)
    assert out.shape == (B * OUT,), out.shape
    assert jnp.allclose(out, ref, atol=1e-4, rtol=1e-4), (out, ref)

    print("KERNEL_OK")
</pallas_src>

<mosaic_0001>
module attributes {stable_mosaic.version = 11 : i64} {
  func.func @_head_kernel(%arg0: i32, %arg1: memref<8x48xf32, #tpu.memory_space<vmem>>, %arg2: memref<48x128xf32, #tpu.memory_space<vmem>>, %arg3: memref<1x128xf32, #tpu.memory_space<vmem>>, %arg4: memref<8x4xf32, #tpu.memory_space<vmem>>) attributes {dimension_semantics = [#tpu.dimension_semantics<parallel>], iteration_bounds = array<i64: 1>, scalar_prefetch = 0 : i64, scratch_operands = 0 : i64, tpu.core_type = #tpu.core_type<tc>, window_params = [{transform_indices = @transform_0, window_bounds = array<i64: 8, 48>}, {pipeline_mode = #tpu.pipeline_mode<synchronous>, transform_indices = @transform_1, window_bounds = array<i64: 48, 128>}, {pipeline_mode = #tpu.pipeline_mode<synchronous>, transform_indices = @transform_2, window_bounds = array<i64: 1, 128>}, {transform_indices = @transform_3, window_bounds = array<i64: 8, 4>}]} {
    %c0 = arith.constant 0 : index
    %c0_0 = arith.constant 0 : index
    %0 = vector.load %arg1[%c0, %c0_0] : memref<8x48xf32, #tpu.memory_space<vmem>>, vector<8x48xf32>
    %1 = arith.negf %0 : vector<8x48xf32>
    %2 = math.exp %1 : vector<8x48xf32>
    %cst = arith.constant 1.000000e+00 : f32
    %3 = vector.broadcast %cst : f32 to vector<8x48xf32>
    %4 = arith.addf %3, %2 : vector<8x48xf32>
    %5 = arith.divf %3, %4 : vector<8x48xf32>
    %6 = arith.mulf %0, %5 : vector<8x48xf32>
    %c0_1 = arith.constant 0 : index
    %c0_2 = arith.constant 0 : index
    %7 = vector.load %arg2[%c0_1, %c0_2] : memref<48x128xf32, #tpu.memory_space<vmem>>, vector<48x128xf32>
    %cst_3 = arith.constant dense<0.000000e+00> : vector<8x128xf32>
    %8 = tpu.matmul %6, %7, %cst_3 {dimension_numbers = #tpu.dot_dimension_numbers<[1], [0], [0], [1], [0, 0, 1, 1], [], []>} : vector<8x48xf32>, vector<48x128xf32>, vector<8x128xf32> -> vector<8x128xf32>
    %c0_4 = arith.constant 0 : index
    %c0_5 = arith.constant 0 : index
    %9 = vector.load %arg3[%c0_4, %c0_5] : memref<1x128xf32, #tpu.memory_space<vmem>>, vector<1x128xf32>
    %10 = vector.broadcast %9 : vector<1x128xf32> to vector<8x128xf32>
    %11 = arith.addf %8, %10 : vector<8x128xf32>
    %12 = vector.extract_strided_slice %11 {offsets = [0, 0], sizes = [8, 4], strides = [1, 1]} : vector<8x128xf32> to vector<8x4xf32>
    %c0_6 = arith.constant 0 : index
    %c0_7 = arith.constant 0 : index
    %13 = vector.load %arg4[%c0_6, %c0_7] : memref<8x4xf32, #tpu.memory_space<vmem>>, vector<8x4xf32>
    tpu.vector_store %arg4[%c0_6, %c0_7], %12 {strides = array<i32>} : memref<8x4xf32, #tpu.memory_space<vmem>>, vector<8x4xf32>,
    return
  }
  func.func @transform_0(%arg0: i32) -> (i32, i32) {
    %c0_i32 = arith.constant 0 : i32
    %c0_i32_0 = arith.constant 0 : i32
    return %arg0, %c0_i32 : i32, i32
  }
  func.func @transform_1(%arg0: i32) -> (i32, i32) {
    %c0_i32 = arith.constant 0 : i32
    %c0_i32_0 = arith.constant 0 : i32
    %c0_i32_1 = arith.constant 0 : i32
    return %c0_i32, %c0_i32_0 : i32, i32
  }
  func.func @transform_2(%arg0: i32) -> (i32, i32) {
    %c0_i32 = arith.constant 0 : i32
    %c0_i32_0 = arith.constant 0 : i32
    %c0_i32_1 = arith.constant 0 : i32
    return %c0_i32, %c0_i32_0 : i32, i32
  }
  func.func @transform_3(%arg0: i32) -> (i32, i32) {
    %c0_i32 = arith.constant 0 : i32
    %c0_i32_0 = arith.constant 0 : i32
    return %arg0, %c0_i32 : i32, i32
  }
}

</mosaic_0001>

<llo_original>
// kernel: tpu_custom_call.1
$region0: #{tpu_custom_call.1}
  #allocation0 [shape = 'u32[]', space=smem, size = 0x4, offset = 0x4, fixed_abs, tag = 'smem constant byte address 0x4 - core index']
  #allocation1 [shape = 'u32[144,128]{1,0:T(1,128)}', space=vmem, size = 0x12000, scoped, tag = 'internal scratch']
  %s0 = inlined_call_operand.hbm [shape: f32[2,48], index: 0, kind: input, shape index: {}]
  %s1 = inlined_call_operand.hbm [shape: f32[48,128], index: 1, kind: input, shape index: {}]
  %s2 = inlined_call_operand.vmem [shape: f32[1,128], index: 2, kind: input, shape index: {}]
  %s3 = inlined_call_operand.hbm [shape: f32[2,4], index: 3, kind: output, shape index: {}]
  %s4 = sld [smem:[#allocation0]]
  $region30: #{tpu_custom_call.1} parent=0
    _
  %s6 = ssub.s32 1, %s4
  %s7 = scalar_select 0, %s6, %s4
  $region1: #{tpu_custom_call.1} parent=0
    #allocation2 [shape = 'u8[4096]{0}', space=vmem, size = 0x1000, scoped, tag = 'input window, operand 0, single buffered']
    #allocation3 [shape = 's32[1]{0}', space=sflag, size = 0x4, scoped, tag = 'scoped memory for tpu_custom_call.1']
    #allocation4 [shape = 's32[1]{0}', space=sflag, size = 0x4, scoped, tag = 'scoped memory for tpu_custom_call.1']
    #allocation5 [shape = 'u8[24576]{0}', space=vmem, size = 0x6000, scoped, tag = 'input window, operand 1, single buffered']
    #allocation6 [shape = 's32[1]{0}', space=sflag, size = 0x4, scoped, tag = 'scoped memory for tpu_custom_call.1']
    #allocation7 [shape = 'u8[4096]{0}', space=vmem, size = 0x1000, scoped, tag = 'output window, operand 0, single buffered']
    %8 = vsyncpa [#allocation3], 0
    %9 = vsyncpa [#allocation6], 0
    %10 = vsyncpa [#allocation4], 0
    // Predicated region
    $region2: #{tpu_custom_call.1} parent=1 // pred_check
      _
    $region3: #{tpu_custom_call.1} parent=1 // pred_check_branch
      %12 = sbr.rel (0) target = $region5
    $region4: #{tpu_custom_call.1} parent=1 // pred_region
      %s14 = ssub.s32 128, 32
      %15 = vsyncadd [#allocation3], %s14
      %s16 = sshll.u32 [#allocation2], 4
      %s17 = int_to_ptr.vmem [resolvable:$true] %s16
      %22 = dma.hbm_to_vmem [thread:$0]  %s0, 32, %s17, [#allocation3], 32, 32, 2
    $region5: #{tpu_custom_call.1} parent=1 // pred_fallthru
      _
    // Predicated region
    $region6: #{tpu_custom_call.1} parent=1 // pred_check
      _
    $region7: #{tpu_custom_call.1} parent=1 // pred_check_branch
      %24 = sbr.rel (0) target = $region9
    $region8: #{tpu_custom_call.1} parent=1 // pred_region
      %s26 = ssub.s32 768, 768
      %27 = vsyncadd [#allocation6], %s26
      %s28 = sshll.u32 [#allocation5], 4
      %s29 = int_to_ptr.vmem [resolvable:$true] %s28
      %34 = dma.hbm_to_vmem [thread:$0]  %s1, 768, %s29, [#allocation6], 128, 128, 8
    $region9: #{tpu_custom_call.1} parent=1 // pred_fallthru
      _
    // Predicated region
    $region10: #{tpu_custom_call.1} parent=1 // pred_check
      _
    $region11: #{tpu_custom_call.1} parent=1 // pred_check_branch
      %36 = sbr.rel (0) target = $region13
    $region12: #{tpu_custom_call.1} parent=1 // pred_region
      _
    $region13: #{tpu_custom_call.1} parent=1 // pred_fallthru
      _
    // Predicated region
    $region14: #{tpu_custom_call.1} parent=1 // pred_check
      _
    $region15: #{tpu_custom_call.1} parent=1 // pred_check_branch
      %38 = sbr.rel (0) target = $region17
    $region16: #{tpu_custom_call.1} parent=1 // pred_region
      %39 = dma.done [#allocation3], 128
    $region17: #{tpu_custom_call.1} parent=1 // pred_fallthru
      _
    // Predicated region
    $region18: #{tpu_custom_call.1} parent=1 // pred_check
      _
    $region19: #{tpu_custom_call.1} parent=1 // pred_check_branch
      %41 = sbr.rel (0) target = $region21
    $region20: #{tpu_custom_call.1} parent=1 // pred_region
      %42 = dma.done [#allocation6], 768
    $region21: #{tpu_custom_call.1} parent=1 // pred_fallthru
      _
    %v43 = vld [vmem:[#allocation2] sm:$0xff]
    %v44 = vxor.u32 %v43, 2147483648
    %v45 = vmul.f32 %v44, 1.442695
    %v46 = vpow.pop %v45
    %v47 = vadd.f32 %v46, 1.0
    %v48 = vrcp.pop %v47
    %v49 = vmul.f32 1.0, %v48
    %v50 = vmul.f32 %v43, %v49
    %v51 = vld [vmem:[#allocation5] sm:$0xff]
    %v52 = vld [vmem:[#allocation5 + $0x8] sm:$0xff]
    %v53 = vld [vmem:[#allocation5 + $0x10] sm:$0xff]
    %v54 = vld [vmem:[#allocation5 + $0x18] sm:$0xff]
    %v55 = vld [vmem:[#allocation5 + $0x20] sm:$0xff]
    %v56 = vld [vmem:[#allocation5 + $0x28] sm:$0xff]
    %v57 = vld [vmem:[%s2] sm:$0x1]
    %v59 = vlaneseq
    %v60 = vshrl.u32 %v59, 7
    %v61 = vsub.s32 0, %v60
    %v62 = vrot.slane %v57, %v61
    %vm64 = vcmask 392192
    %v66 = vsel %vm64, %v50, 0
    %68 = vmatprep.subr.mxu0 0.0
    %69 = vmatpush1.msra.mxu0 0.0
    %70 = vmatprep.subr.mxu0 0.0
    %71 = vmatpush1.msra.mxu0 0.0
    %72 = vmatprep.subr.mxu0 0.0
    %73 = vmatpush1.msra.mxu0 0.0
    %74 = vmatprep.subr.mxu0 0.0
    %75 = vmatpush1.msra.mxu0 0.0
    %76 = vmatprep.subr.mxu0 0.0
    %77 = vmatpush1.msra.mxu0 0.0
    %78 = vmatprep.subr.mxu0 0.0
    %79 = vmatpush1.msra.mxu0 0.0
    %80 = vmatprep.subr.mxu0 0.0
    %81 = vmatpush1.msra.mxu0 0.0
    %82 = vmatprep.subr.mxu0 0.0
    %83 = vmatpush1.msra.mxu0 0.0
    %84 = vmatprep.subr.mxu0 0.0
    %85 = vmatpush1.msra.mxu0 0.0
    %86 = vmatprep.subr.mxu0 0.0
    %87 = vmatpush1.msra.mxu0 0.0
    %88 = vmatprep.subr.mxu0 0.0
    %89 = vmatpush1.msra.mxu0 %v56
    %90 = vmatprep.subr.mxu0 0.0
    %91 = vmatpush1.msra.mxu0 %v55
    %92 = vmatprep.subr.mxu0 0.0
    %93 = vmatpush1.msra.mxu0 %v54
    %94 = vmatprep.subr.mxu0 0.0
    %95 = vmatpush1.msra.mxu0 %v53
    %96 = vmatprep.subr.mxu0 0.0
    %97 = vmatpush1.msra.mxu0 %v52
    %98 = vmatprep.subr.mxu0 0.0
    %99 = vmatpush1.msra.mxu0 %v51
    %100 = vmatprep.subr.mxu0 0.0
    %101 = vmatpush2.msra.mxu0 0.0
    %102 = vmatprep.subr.mxu0 0.0
    %103 = vmatpush2.msra.mxu0 0.0
    %104 = vmatprep.subr.mxu0 0.0
    %105 = vmatpush2.msra.mxu0 0.0
    %106 = vmatprep.subr.mxu0 0.0
    %107 = vmatpush2.msra.mxu0 0.0
    %108 = vmatprep.subr.mxu0 0.0
    %109 = vmatpush2.msra.mxu0 0.0
    %110 = vmatprep.subr.mxu0 0.0
    %111 = vmatpush2.msra.mxu0 0.0
    %112 = vmatprep.subr.mxu0 0.0
    %113 = vmatpush2.msra.mxu0 0.0
    %114 = vmatprep.subr.mxu0 0.0
    %115 = vmatpush2.msra.mxu0 0.0
    %116 = vmatprep.subr.mxu0 0.0
    %117 = vmatpush2.msra.mxu0 0.0
    %118 = vmatprep.subr.mxu0 0.0
    %119 = vmatpush2.msra.mxu0 0.0
    %120 = vmatprep.subr.mxu0 0.0
    %121 = vmatpush2.msra.mxu0 0.0
    %122 = vmatprep.subr.mxu0 0.0
    %123 = vmatpush2.msra.mxu0 0.0
    %124 = vmatprep.subr.mxu0 0.0
    %125 = vmatpush2.msra.mxu0 0.0
    %126 = vmatprep.subr.mxu0 0.0
    %127 = vmatpush2.msra.mxu0 0.0
    %128 = vmatprep.subr.mxu0 0.0
    %129 = vmatpush2.msra.mxu0 0.0
    %130 = vmatprep.subr.mxu0 0.0
    %131 = vmatpush2.msra.mxu0 0.0
    %132 = vmatprep.mubr.f32.mxu0 0.0
    %133 = vmatmul.mubr.f32.gmra.mxu0 %v66
    %v134 = vpop.f32.mrf.mxu0
    %v135 = vadd.f32 %v62, %v134
    %v136 = vpop.f32.mrf.mxu0
    %137 = vdwg.mxu0
    %vm138 = vcmask 31744
    %139 = vst.msk [vmem:[#allocation7] sm:$0xff] %vm138, %v135
    // Predicated region
    $region22: #{tpu_custom_call.1} parent=1 // pred_check
      _
    $region23: #{tpu_custom_call.1} parent=1 // pred_check_branch
      %141 = sbr.rel (0) target = $region25
    $region24: #{tpu_custom_call.1} parent=1 // pred_region
      %s143 = ssub.s32 128, 32
      %144 = vsyncadd [#allocation4], %s143
      %s145 = sshll.u32 [#allocation7], 4
      %s146 = int_to_ptr.vmem [resolvable:$true] %s145
      %151 = dma.vmem_to_hbm [thread:$0]  %s146, 32, %s3, [#allocation4], 32, 32, 2
    $region25: #{tpu_custom_call.1} parent=1 // pred_fallthru
      _
    // Predicated region
    $region26: #{tpu_custom_call.1} parent=1 // pred_check
      _
    $region27: #{tpu_custom_call.1} parent=1 // pred_check_branch
      %153 = sbr.rel (0) target = $region29
    $region28: #{tpu_custom_call.1} parent=1 // pred_region
      %154 = dma.done [#allocation4], 128
    $region29: #{tpu_custom_call.1} parent=1 // pred_fallthru
      _
    %155 = vsyncpa [#allocation3], 1
    %156 = vsyncpa [#allocation6], 1
    %157 = vsyncpa [#allocation4], 1

</llo_original>
